<compile_context>
chip_gen: v7x
topology: tpu7x:2x2x1
jax: 0.10.0
libtpu: 0.0.40
codegen_flags: <defaults>
</compile_context>

<pallas_src>
import functools
import math

import jax
import jax.numpy as jnp
from jax.experimental import pallas as pl
from jax.experimental.pallas import tpu as pltpu


def _sdpa_kernel(q_ref, k_ref, v_ref, o_ref, *, inv_sqrt_c, mxu_dtype):
    # One (batch, M-tile) per grid step; blocks carry a leading squeezable 1.
    q = q_ref[0]            # (N, C)
    k = k_ref[0]            # (C, TM)
    v = v_ref[0]            # (D, N)

    # Fold 1/sqrt(C) into the (C, TM) k tile (cheaper than rescaling the resident
    # (N, C) q block every grid step for typical N >> C). Scale in f32, then cast.
    k_scaled = (k.astype(jnp.float32) * inv_sqrt_c).astype(mxu_dtype)

    # scores = q @ (k / sqrt(C))  -> (N, TM), f32 accumulation on the MXU.
    scores = jnp.dot(q.astype(mxu_dtype), k_scaled,
                     preferred_element_type=jnp.float32)

    # softmax over dim=-2 (the N axis): each column is normalized independently.
    m = jnp.max(scores, axis=0, keepdims=True)            # (1, TM)
    e = jnp.exp(scores - m)                                # (N, TM), f32, unnormalized
    s = jnp.sum(e, axis=0, keepdims=True)                  # (1, TM), f32

    # out = v @ softmax == (v @ e) * (1/s): normalizer commutes through the
    # N-contraction, so normalize the (D, TM) result instead of the (N, TM) map.
    out = jnp.dot(v.astype(mxu_dtype), e.astype(mxu_dtype),
                  preferred_element_type=jnp.float32)      # (D, TM)
    inv_s = pl.reciprocal(s, approx=True)                  # EUP, ~1 ulp
    o_ref[0] = (out * inv_s).astype(o_ref.dtype)


def _vmem_bytes_estimate(N, C, D, tm, in_itemsize):
    """Per-step VMEM footprint: double-buffered blocks + f32 temporaries."""
    blocks = 2 * (N * C + D * N + C * tm + D * tm) * in_itemsize
    temps = 2 * N * tm * 4 + D * tm * 4   # scores + e (f32) + f32 matmul result
    return blocks + temps


def _pick_m_tile(M, block_m, N, C, D, in_itemsize, budget_bytes):
    """Pick a lane-dense M tile that fits the VMEM budget."""
    if M <= block_m:
        return M
    # Snap down to a multiple of 256 (full v6e/v7x MXU width); floor at 128.
    tm = (block_m // 256) * 256
    if tm == 0:
        tm = 128
    # Shrink (keeping 128 alignment) until the per-step footprint fits.
    while tm > 128 and _vmem_bytes_estimate(N, C, D, tm, in_itemsize) > budget_bytes:
        tm = max(128, (tm // 2) // 128 * 128)
    return tm


def scaled_dot_product_attention(q, k, v, *, block_m=256, mxu_dtype=jnp.bfloat16,
                                 vmem_limit_bytes=None):
    """q: (B, N, C), k: (B, C, M), v: (B, D, N) -> (B, D, M)."""
    B, N, C = q.shape
    Bk, Ck, M = k.shape
    Bv, D, Nv = v.shape
    assert B == Bk == Bv and C == Ck and N == Nv

    in_itemsize = jnp.dtype(q.dtype).itemsize
    budget_bytes = 48 * 1024 * 1024                 # headroom vs v7x's 64 MiB VMEM
    tm = _pick_m_tile(M, block_m, N, C, D, in_itemsize, budget_bytes)
    grid = (B, pl.cdiv(M, tm))                      # partial last M tile is padded/masked

    if vmem_limit_bytes is None:
        est = _vmem_bytes_estimate(N, C, D, tm, in_itemsize)
        # Above v5e's 16 MiB default scoped limit, within v7x's 64 MiB physical VMEM.
        vmem_limit_bytes = int(min(max(2 * est, 32 * 1024 * 1024), 64 * 1024 * 1024))

    kernel = functools.partial(_sdpa_kernel,
                               inv_sqrt_c=1.0 / math.sqrt(C),
                               mxu_dtype=mxu_dtype)

    return pl.pallas_call(
        kernel,
        out_shape=jax.ShapeDtypeStruct((B, D, M), q.dtype),
        grid_spec=pltpu.PrefetchScalarGridSpec(
            num_scalar_prefetch=0,
            grid=grid,
            in_specs=[
                pl.BlockSpec((1, N, C), lambda b, m: (b, 0, 0)),   # q: full per batch, resident
                pl.BlockSpec((1, C, tm), lambda b, m: (b, 0, m)),  # k: M-tiled
                pl.BlockSpec((1, D, N), lambda b, m: (b, 0, 0)),   # v: full per batch, resident
            ],
            out_specs=pl.BlockSpec((1, D, tm), lambda b, m: (b, 0, m)),
        ),
        compiler_params=pltpu.CompilerParams(
            dimension_semantics=("parallel", "parallel"),
            vmem_limit_bytes=vmem_limit_bytes,
        ),
    )(q, k, v)


def _reference(q, k, v):
    c = q.shape[-1]
    attn = jnp.matmul(q, k) / math.sqrt(c)
    attn = jax.nn.softmax(attn, axis=-2)
    return jnp.matmul(v, attn)


# TODO(synk): dropout branch (dropout is not None) not implemented; module default is dropout=None.
# TODO(synk): a two-pass N-split (for N so large that the (N,C)/(D,N) blocks themselves exceed
#             VMEM) is not implemented; current kernel streams full-N operands per batch element.

if __name__ == "__main__":
    key = jax.random.PRNGKey(0)
    kq, kk, kv = jax.random.split(key, 3)

    B, N, C, M, D = 2, 8, 32, 8, 32
    q = jax.random.normal(kq, (B, N, C), dtype=jnp.float32)
    k = jax.random.normal(kk, (B, C, M), dtype=jnp.float32)
    v = jax.random.normal(kv, (B, D, N), dtype=jnp.float32)

    ref = _reference(q, k, v)

    # Bit-faithful path (f32 MXU feeds): matches the PyTorch module up to float
    # rounding + the approximate EUP reciprocal (~1e-4 relative).
    out_f32 = jax.block_until_ready(
        scaled_dot_product_attention(q, k, v, mxu_dtype=jnp.float32))
    assert out_f32.shape == (B, D, M)
    assert jnp.allclose(out_f32, ref, rtol=5e-3, atol=5e-3), "f32 path mismatch vs reference"

    # Default fast path (bf16 MXU feeds, f32 accumulation).
    out = jax.block_until_ready(scaled_dot_product_attention(q, k, v))
    assert out.shape == (B, D, M)
    assert jnp.allclose(out, ref, rtol=5e-2, atol=5e-2), "bf16 path mismatch vs reference"

    print("KERNEL_OK")
</pallas_src>

<mosaic_0001>
module attributes {stable_mosaic.version = 11 : i64} {
  func.func @_sdpa_kernel(%arg0: i32, %arg1: i32, %arg2: memref<1x8x32xf32, #tpu.memory_space<vmem>>, %arg3: memref<1x32x8xf32, #tpu.memory_space<vmem>>, %arg4: memref<1x32x8xf32, #tpu.memory_space<vmem>>, %arg5: memref<1x32x8xf32, #tpu.memory_space<vmem>>) attributes {dimension_semantics = [#tpu.dimension_semantics<parallel>, #tpu.dimension_semantics<parallel>], iteration_bounds = array<i64: 2, 1>, scalar_prefetch = 0 : i64, scratch_operands = 0 : i64, tpu.core_type = #tpu.core_type<tc>, window_params = [{transform_indices = @transform_0, window_bounds = array<i64: 1, 8, 32>}, {transform_indices = @transform_1, window_bounds = array<i64: 1, 32, 8>}, {transform_indices = @transform_2, window_bounds = array<i64: 1, 32, 8>}, {transform_indices = @transform_3, window_bounds = array<i64: 1, 32, 8>}]} {
    %c0 = arith.constant 0 : index
    %c0_0 = arith.constant 0 : index
    %c0_1 = arith.constant 0 : index
    %0 = vector.load %arg2[%c0, %c0_0, %c0_1] : memref<1x8x32xf32, #tpu.memory_space<vmem>>, vector<1x8x32xf32>
    %1 = vector.shape_cast %0 : vector<1x8x32xf32> to vector<8x32xf32>
    %c0_2 = arith.constant 0 : index
    %c0_3 = arith.constant 0 : index
    %c0_4 = arith.constant 0 : index
    %2 = vector.load %arg3[%c0_2, %c0_3, %c0_4] : memref<1x32x8xf32, #tpu.memory_space<vmem>>, vector<1x32x8xf32>
    %3 = vector.shape_cast %2 : vector<1x32x8xf32> to vector<32x8xf32>
    %c0_5 = arith.constant 0 : index
    %c0_6 = arith.constant 0 : index
    %c0_7 = arith.constant 0 : index
    %4 = vector.load %arg4[%c0_5, %c0_6, %c0_7] : memref<1x32x8xf32, #tpu.memory_space<vmem>>, vector<1x32x8xf32>
    %5 = vector.shape_cast %4 : vector<1x32x8xf32> to vector<32x8xf32>
    %cst = arith.constant 0.176776692 : f32
    %6 = vector.broadcast %cst : f32 to vector<32x8xf32>
    %7 = arith.mulf %3, %6 : vector<32x8xf32>
    %cst_8 = arith.constant dense<0.000000e+00> : vector<8x8xf32>
    %8 = tpu.matmul %1, %7, %cst_8 {dimension_numbers = #tpu.dot_dimension_numbers<[1], [0], [0], [1], [0, 0, 1, 1], [], []>} : vector<8x32xf32>, vector<32x8xf32>, vector<8x8xf32> -> vector<8x8xf32>
    %cst_9 = arith.constant dense<0xFF800000> : vector<8xf32>
    %9 = vector.multi_reduction <maximumf>, %8, %cst_9 [0] : vector<8x8xf32> to vector<8xf32>
    %10 = vector.shape_cast %9 : vector<8xf32> to vector<1x8xf32>
    %11 = vector.broadcast %10 : vector<1x8xf32> to vector<8x8xf32>
    %12 = arith.subf %8, %11 : vector<8x8xf32>
    %13 = math.exp %12 : vector<8x8xf32>
    %cst_10 = arith.constant dense<0.000000e+00> : vector<8xf32>
    %14 = vector.multi_reduction <add>, %13, %cst_10 [0] : vector<8x8xf32> to vector<8xf32>
    %15 = vector.shape_cast %14 : vector<8xf32> to vector<1x8xf32>
    %cst_11 = arith.constant dense<0.000000e+00> : vector<32x8xf32>
    %16 = tpu.matmul %5, %13, %cst_11 {dimension_numbers = #tpu.dot_dimension_numbers<[1], [0], [0], [1], [0, 0, 1, 1], [], []>} : vector<32x8xf32>, vector<8x8xf32>, vector<32x8xf32> -> vector<32x8xf32>
    %17 = tpu.reciprocal %15 {approx = true} : vector<1x8xf32> -> vector<1x8xf32>
    %18 = vector.broadcast %17 : vector<1x8xf32> to vector<32x8xf32>
    %19 = arith.mulf %16, %18 : vector<32x8xf32>
    %c0_12 = arith.constant 0 : index
    %c0_13 = arith.constant 0 : index
    %c0_14 = arith.constant 0 : index
    %20 = vector.load %arg5[%c0_12, %c0_13, %c0_14] : memref<1x32x8xf32, #tpu.memory_space<vmem>>, vector<1x32x8xf32>
    %21 = vector.shape_cast %20 : vector<1x32x8xf32> to vector<32x8xf32>
    %22 = vector.shape_cast %19 : vector<32x8xf32> to vector<1x32x8xf32>
    tpu.vector_store %arg5[%c0_12, %c0_13, %c0_14], %22 {strides = array<i32>} : memref<1x32x8xf32, #tpu.memory_space<vmem>>, vector<1x32x8xf32>,
    return
  }
  func.func @transform_0(%arg0: i32, %arg1: i32) -> (i32, i32, i32) {
    %c0_i32 = arith.constant 0 : i32
    %c0_i32_0 = arith.constant 0 : i32
    %c0_i32_1 = arith.constant 0 : i32
    return %arg0, %c0_i32, %c0_i32_0 : i32, i32, i32
  }
  func.func @transform_1(%arg0: i32, %arg1: i32) -> (i32, i32, i32) {
    %c0_i32 = arith.constant 0 : i32
    %c0_i32_0 = arith.constant 0 : i32
    return %arg0, %c0_i32, %arg1 : i32, i32, i32
  }
  func.func @transform_2(%arg0: i32, %arg1: i32) -> (i32, i32, i32) {
    %c0_i32 = arith.constant 0 : i32
    %c0_i32_0 = arith.constant 0 : i32
    %c0_i32_1 = arith.constant 0 : i32
    return %arg0, %c0_i32, %c0_i32_0 : i32, i32, i32
  }
  func.func @transform_3(%arg0: i32, %arg1: i32) -> (i32, i32, i32) {
    %c0_i32 = arith.constant 0 : i32
    %c0_i32_0 = arith.constant 0 : i32
    return %arg0, %c0_i32, %arg1 : i32, i32, i32
  }
}

</mosaic_0001>

<llo_original>
// kernel: tpu_custom_call.1
$region0: #{tpu_custom_call.1}
  #allocation0 [shape = 'u32[]', space=smem, size = 0x4, offset = 0x4, fixed_abs, tag = 'smem constant byte address 0x4 - core index']
  #allocation1 [shape = 'u32[144,128]{1,0:T(1,128)}', space=vmem, size = 0x12000, scoped, tag = 'internal scratch']
  %s0 = inlined_call_operand.vmem [shape: f32[2,8,32], index: 0, kind: input, shape index: {}]
  %s1 = inlined_call_operand.vmem [shape: f32[2,32,8], index: 1, kind: input, shape index: {}]
  %s2 = inlined_call_operand.vmem [shape: f32[2,32,8], index: 2, kind: input, shape index: {}]
  %s3 = inlined_call_operand.vmem [shape: f32[2,32,8], index: 3, kind: output, shape index: {}]
  %s4 = sld [smem:[#allocation0]]
  $region45: #{tpu_custom_call.1} parent=0
    _
  %s6 = ssub.s32 1, %s4
  %s7 = scalar_select 0, %s6, %s4
  loop: start=0, step=1, limit=4
  $region2: #{tpu_custom_call.1} parent=0 // loop_pre_header
    _
  $region3: #{tpu_custom_call.1} parent=0 // loop_header
    %s9 = sphi 0, %s13
    %p10 = scmp.ge.s32.totalorder %s9, 4
    %s16 = sphi 0, %s28
    %s17 = sphi 0, %s24
    %s18 = sphi 0, %s16
    %s19 = sphi 0, %s17
    %s20 = sphi 0, %s18
    %s21 = sphi 0, %s19
    %s31 = sphi 0, %s33
    %s34 = sphi 0, %s31
    %s35 = sphi 0, %s34
    %s51 = sphi 0, %s35
    %s59 = sphi 0, %s61
    %s62 = sphi 0, %s59
    %s63 = sphi 0, %s62
    %s79 = sphi 0, %s63
    %s85 = sphi 0, %s87
    %s88 = sphi 0, %s85
    %s89 = sphi 0, %s88
    %s105 = sphi 0, %s89
    %s113 = sphi 0, %s115
    %s116 = sphi 0, %s113
    %s117 = sphi 0, %s116
    %s133 = sphi 0, %s117
  $region4: #{tpu_custom_call.1} parent=0 // loop_header_branch
    %12 = sbr.rel (%p10) target = $region8
  $region5: #{tpu_custom_call.1} parent=0 // loop_body
    %s14 = ssub.s32 %s9, 1
    %s15 = ssub.s32 %s9, 2
    %s22 = sadd.s32 1, %s17
    %p23 = scmp.ge.s32.totalorder %s22, 1
    %s24 = scalar_select %p23, 0, %s22
    %s25 = sadd.s32 1, %s16
    %s26 = scalar_select %p23, %s25, %s16
    %p27 = scmp.ge.s32.totalorder %s26, 2
    %s28 = scalar_select %p27, 0, %s26
    %s29 = ssub.s32 %s16, %s28
    %p30 = scmp.eq.s32.totalorder %s29, 0
    %s32 = sadd.s32 %s31, 1
    %s33 = scalar_select %p30, %s31, %s32
    %p36 = pneg %p30
    %p37 = scmp.eq.s32.totalorder %s9, 1
    %p38 = por %p36, %p37
    %p39 = scmp.ne.s32.totalorder %s31, %s34
    %p40 = scmp.eq.s32.totalorder %s9, 0
    %p41 = por %p39, %p40
    %p42 = scmp.ne.s32.totalorder %s31, %s34
    %p43 = scmp.eq.s32.totalorder %s14, 1
    %p44 = por %p42, %p43
    %p45 = scmp.ne.s32.totalorder %s34, %s35
    %p46 = scmp.eq.s32.totalorder %s14, 0
    %p47 = por %p45, %p46
    %p48 = scmp.ne.s32.totalorder %s34, %s35
    %p49 = scmp.eq.s32.totalorder %s15, 1
    %p50 = por %p48, %p49
    %p52 = scmp.ne.s32.totalorder %s35, %s51
    %p53 = scmp.eq.s32.totalorder %s15, 0
    %p54 = por %p52, %p53
    %s55 = ssub.s32 %s16, %s28
    %s56 = ssub.s32 %s17, %s24
    %s57 = sor.u32 %s55, %s56
    %p58 = scmp.eq.s32.totalorder %s57, 0
    %s60 = sadd.s32 %s59, 1
    %s61 = scalar_select %p58, %s59, %s60
    %p64 = pneg %p58
    %p65 = scmp.eq.s32.totalorder %s9, 1
    %p66 = por %p64, %p65
    %p67 = scmp.ne.s32.totalorder %s59, %s62
    %p68 = scmp.eq.s32.totalorder %s9, 0
    %p69 = por %p67, %p68
    %p70 = scmp.ne.s32.totalorder %s59, %s62
    %p71 = scmp.eq.s32.totalorder %s14, 1
    %p72 = por %p70, %p71
    %p73 = scmp.ne.s32.totalorder %s62, %s63
    %p74 = scmp.eq.s32.totalorder %s14, 0
    %p75 = por %p73, %p74
    %p76 = scmp.ne.s32.totalorder %s62, %s63
    %p77 = scmp.eq.s32.totalorder %s15, 1
    %p78 = por %p76, %p77
    %p80 = scmp.ne.s32.totalorder %s63, %s79
    %p81 = scmp.eq.s32.totalorder %s15, 0
    %p82 = por %p80, %p81
    %s83 = ssub.s32 %s16, %s28
    %p84 = scmp.eq.s32.totalorder %s83, 0
    %s86 = sadd.s32 %s85, 1
    %s87 = scalar_select %p84, %s85, %s86
    %p90 = pneg %p84
    %p91 = scmp.eq.s32.totalorder %s9, 1
    %p92 = por %p90, %p91
    %p93 = scmp.ne.s32.totalorder %s85, %s88
    %p94 = scmp.eq.s32.totalorder %s9, 0
    %p95 = por %p93, %p94
    %p96 = scmp.ne.s32.totalorder %s85, %s88
    %p97 = scmp.eq.s32.totalorder %s14, 1
    %p98 = por %p96, %p97
    %p99 = scmp.ne.s32.totalorder %s88, %s89
    %p100 = scmp.eq.s32.totalorder %s14, 0
    %p101 = por %p99, %p100
    %p102 = scmp.ne.s32.totalorder %s88, %s89
    %p103 = scmp.eq.s32.totalorder %s15, 1
    %p104 = por %p102, %p103
    %p106 = scmp.ne.s32.totalorder %s89, %s105
    %p107 = scmp.eq.s32.totalorder %s15, 0
    %p108 = por %p106, %p107
    %s109 = ssub.s32 %s16, %s28
    %s110 = ssub.s32 %s17, %s24
    %s111 = sor.u32 %s109, %s110
    %p112 = scmp.eq.s32.totalorder %s111, 0
    %s114 = sadd.s32 %s113, 1
    %s115 = scalar_select %p112, %s113, %s114
    %p118 = pneg %p112
    %p119 = scmp.eq.s32.totalorder %s9, 1
    %p120 = por %p118, %p119
    %p121 = scmp.ne.s32.totalorder %s113, %s116
    %p122 = scmp.eq.s32.totalorder %s9, 0
    %p123 = por %p121, %p122
    %p124 = scmp.ne.s32.totalorder %s113, %s116
    %p125 = scmp.eq.s32.totalorder %s14, 1
    %p126 = por %p124, %p125
    %p127 = scmp.ne.s32.totalorder %s116, %s117
    %p128 = scmp.eq.s32.totalorder %s14, 0
    %p129 = por %p127, %p128
    %p130 = scmp.ne.s32.totalorder %s116, %s117
    %p131 = scmp.eq.s32.totalorder %s15, 1
    %p132 = por %p130, %p131
    %p134 = scmp.ne.s32.totalorder %s117, %s133
    %p135 = scmp.eq.s32.totalorder %s15, 0
    %p136 = por %p134, %p135
    %p137 = scmp.le.s32.totalorder 1, %s9
    %p138 = scmp.lt.s32.totalorder %s9, 3
    %p139 = pnand %p137, %p138
    %p140 = pneg %p139
    // Predicated region
    $region9: #{tpu_custom_call.1} parent=5 // pred_check
      _
    $region10: #{tpu_custom_call.1} parent=5 // pred_check_branch
      %142 = sbr.rel (%p139) target = $region12
    $region11: #{tpu_custom_call.1} parent=5 // pred_region
      %s143 = ssub.s32 %s9, 1
    $region12: #{tpu_custom_call.1} parent=5 // pred_fallthru
      _
    %p144 = scmp.lt.s32.totalorder %s9, 2
    // Predicated region
    $region13: #{tpu_custom_call.1} parent=5 // pred_check
      %p145 = pneg %p144
    $region14: #{tpu_custom_call.1} parent=5 // pred_check_branch
      %147 = sbr.rel (%p145) target = $region16
    $region15: #{tpu_custom_call.1} parent=5 // pred_region
      // Predicated region
      $region17: #{tpu_custom_call.1} parent=15 // pred_check
        %p148 = pneg %p41
      $region18: #{tpu_custom_call.1} parent=15 // pred_check_branch
        %150 = sbr.rel (%p148) target = $region20
      $region19: #{tpu_custom_call.1} parent=15 // pred_region
        %p151 = scmp.lt.s32.totalorder %s16, 1
        %s152 = scalar_select %p151, %s16, 1
        %s153 = smul.addr %s152, 8
        %s154 = scalar_lea.vmem %s0, %s153
      $region20: #{tpu_custom_call.1} parent=15 // pred_fallthru
        _
      // Predicated region
      $region21: #{tpu_custom_call.1} parent=15 // pred_check
        %p155 = pneg %p69
      $region22: #{tpu_custom_call.1} parent=15 // pred_check_branch
        %157 = sbr.rel (%p155) target = $region24
      $region23: #{tpu_custom_call.1} parent=15 // pred_region
        %p158 = scmp.lt.s32.totalorder %s16, 1
        %s159 = scalar_select %p158, %s16, 1
        %p160 = scmp.lt.s32.totalorder %s17, 0
        %s161 = scalar_select %p160, %s17, 0
        %s162 = smul.addr %s159, 4
        %s163 = sadd.s32 %s161, %s162
        %s164 = smul.addr %s163, 8
        %s165 = scalar_lea.vmem %s1, %s164
      $region24: #{tpu_custom_call.1} parent=15 // pred_fallthru
        _
      // Predicated region
      $region25: #{tpu_custom_call.1} parent=15 // pred_check
        %p166 = pneg %p95
      $region26: #{tpu_custom_call.1} parent=15 // pred_check_branch
        %168 = sbr.rel (%p166) target = $region28
      $region27: #{tpu_custom_call.1} parent=15 // pred_region
        %p169 = scmp.lt.s32.totalorder %s16, 1
        %s170 = scalar_select %p169, %s16, 1
        %s171 = smul.addr %s170, 4
        %s172 = smul.addr %s171, 8
        %s173 = scalar_lea.vmem %s2, %s172
      $region28: #{tpu_custom_call.1} parent=15 // pred_fallthru
        _
    $region16: #{tpu_custom_call.1} parent=5 // pred_fallthru
      _
    %p174 = scmp.le.s32.totalorder 1, %s9
    %p175 = scmp.lt.s32.totalorder %s9, 3
    %p176 = pnand %p174, %p175
    %p177 = pneg %p176
    // Predicated region
    $region29: #{tpu_custom_call.1} parent=5 // pred_check
      _
    $region30: #{tpu_custom_call.1} parent=5 // pred_check_branch
      %179 = sbr.rel (%p176) target = $region32
    $region31: #{tpu_custom_call.1} parent=5 // pred_region
      %s180 = ssub.s32 %s9, 1
      %p181 = scmp.lt.s32.totalorder %s18, 1
      %s182 = scalar_select %p181, %s18, 1
      %s183 = smul.addr %s182, 8
      %s184 = scalar_lea.vmem %s0, %s183
      %p185 = pneg %p47
      %p186 = pneg %p44
      %p187 = scmp.lt.s32.totalorder %s18, 1
      %s188 = scalar_select %p187, %s18, 1
      %p189 = scmp.lt.s32.totalorder %s19, 0
      %s190 = scalar_select %p189, %s19, 0
      %s191 = smul.addr %s188, 4
      %s192 = sadd.s32 %s190, %s191
      %s193 = smul.addr %s192, 8
      %s194 = scalar_lea.vmem %s1, %s193
      %p195 = pneg %p75
      %p196 = pneg %p72
      %p197 = scmp.lt.s32.totalorder %s18, 1
      %s198 = scalar_select %p197, %s18, 1
      %s199 = smul.addr %s198, 4
      %s200 = smul.addr %s199, 8
      %s201 = scalar_lea.vmem %s2, %s200
      %p202 = pneg %p101
      %p203 = pneg %p98
      %p204 = pneg %p129
      %p205 = pneg %p126
      %p206 = scmp.lt.s32.totalorder %s18, 1
      %s207 = scalar_select %p206, %s18, 1
      %p208 = scmp.lt.s32.totalorder %s19, 0
      %s209 = scalar_select %p208, %s19, 0
      %s210 = smul.addr %s207, 4
      %s211 = sadd.s32 %s209, %s210
      %s212 = smul.addr %s211, 8
      %s213 = scalar_lea.vmem %s3, %s212
      %p214 = scmp.lt.s32.totalorder %s18, 1
      %s215 = scalar_select %p214, %s18, 1
      %s216 = smul.addr %s215, 8
      %s217 = scalar_lea.vmem %s0, %s216
      %p218 = scmp.lt.s32.totalorder %s18, 1
      %s219 = scalar_select %p218, %s18, 1
      %p220 = scmp.lt.s32.totalorder %s19, 0
      %s221 = scalar_select %p220, %s19, 0
      %s222 = smul.addr %s219, 4
      %s223 = sadd.s32 %s221, %s222
      %s224 = smul.addr %s223, 8
      %s225 = scalar_lea.vmem %s1, %s224
      %p226 = scmp.lt.s32.totalorder %s18, 1
      %s227 = scalar_select %p226, %s18, 1
      %s228 = smul.addr %s227, 4
      %s229 = smul.addr %s228, 8
      %s230 = scalar_lea.vmem %s2, %s229
      %p231 = scmp.lt.s32.totalorder %s18, 1
      %s232 = scalar_select %p231, %s18, 1
      %p233 = scmp.lt.s32.totalorder %s19, 0
      %s234 = scalar_select %p233, %s19, 0
      %s235 = smul.addr %s232, 4
      %s236 = sadd.s32 %s234, %s235
      %s237 = smul.addr %s236, 8
      %s238 = scalar_lea.vmem %s3, %s237
      %v239 = vld [vmem:[%s217] sm:$0xff]
      %v240 = vld [vmem:[%s225] sm:$0xff]
      %v241 = vld [vmem:[%s225 + $0x8] sm:$0xff]
      %v242 = vld [vmem:[%s225 + $0x10] sm:$0xff]
      %v243 = vld [vmem:[%s225 + $0x18] sm:$0xff]
      %v244 = vld [vmem:[%s230] sm:$0xff]
      %v245 = vld [vmem:[%s230 + $0x8] sm:$0xff]
      %v246 = vld [vmem:[%s230 + $0x10] sm:$0xff]
      %v247 = vld [vmem:[%s230 + $0x18] sm:$0xff]
      %v248 = vmul.f32 %v240, 0.17677669
      %v249 = vmul.f32 %v241, 0.17677669
      %v250 = vmul.f32 %v242, 0.17677669
      %v251 = vmul.f32 %v243, 0.17677669
      %vm252 = vcmask 261120
      %v254 = vsel %vm252, %v239, 0
      %256 = vmatprep.subr.mxu0 0.0
      %257 = vmatpush1.msra.mxu0 %v248
      %258 = vmatprep.subr.mxu0 0.0
      %259 = vmatpush1.msra.mxu0 %v249
      %260 = vmatprep.subr.mxu0 0.0
      %261 = vmatpush1.msra.mxu0 %v250
      %262 = vmatprep.subr.mxu0 0.0
      %263 = vmatpush1.msra.mxu0 %v251
      %264 = vmatprep.subr.mxu0 0.0
      %265 = vmatpush1.msra.mxu0 0.0
      %266 = vmatprep.subr.mxu0 0.0
      %267 = vmatpush1.msra.mxu0 0.0
      %268 = vmatprep.subr.mxu0 0.0
      %269 = vmatpush1.msra.mxu0 0.0
      %270 = vmatprep.subr.mxu0 0.0
      %271 = vmatpush1.msra.mxu0 0.0
      %272 = vmatprep.subr.mxu0 0.0
      %273 = vmatpush1.msra.mxu0 0.0
      %274 = vmatprep.subr.mxu0 0.0
      %275 = vmatpush1.msra.mxu0 0.0
      %276 = vmatprep.subr.mxu0 0.0
      %277 = vmatpush1.msra.mxu0 0.0
      %278 = vmatprep.subr.mxu0 0.0
      %279 = vmatpush1.msra.mxu0 0.0
      %280 = vmatprep.subr.mxu0 0.0
      %281 = vmatpush1.msra.mxu0 0.0
      %282 = vmatprep.subr.mxu0 0.0
      %283 = vmatpush1.msra.mxu0 0.0
      %284 = vmatprep.subr.mxu0 0.0
      %285 = vmatpush1.msra.mxu0 0.0
      %286 = vmatprep.subr.mxu0 0.0
      %287 = vmatpush1.msra.mxu0 0.0
      %288 = vmatprep.subr.mxu0 0.0
      %289 = vmatpush1.msra.mxu0 0.0
      %290 = vmatprep.subr.mxu0 0.0
      %291 = vmatpush1.msra.mxu0 0.0
      %292 = vmatprep.subr.mxu0 0.0
      %293 = vmatpush1.msra.mxu0 0.0
      %294 = vmatprep.subr.mxu0 0.0
      %295 = vmatpush1.msra.mxu0 0.0
      %296 = vmatprep.subr.mxu0 0.0
      %297 = vmatpush1.msra.mxu0 0.0
      %298 = vmatprep.subr.mxu0 0.0
      %299 = vmatpush1.msra.mxu0 0.0
      %300 = vmatprep.subr.mxu0 0.0
      %301 = vmatpush1.msra.mxu0 0.0
      %302 = vmatprep.subr.mxu0 0.0
      %303 = vmatpush1.msra.mxu0 0.0
      %304 = vmatprep.subr.mxu0 0.0
      %305 = vmatpush1.msra.mxu0 0.0
      %306 = vmatprep.subr.mxu0 0.0
      %307 = vmatpush1.msra.mxu0 0.0
      %308 = vmatprep.subr.mxu0 0.0
      %309 = vmatpush1.msra.mxu0 0.0
      %310 = vmatprep.subr.mxu0 0.0
      %311 = vmatpush1.msra.mxu0 0.0
      %312 = vmatprep.subr.mxu0 0.0
      %313 = vmatpush1.msra.mxu0 0.0
      %314 = vmatprep.subr.mxu0 0.0
      %315 = vmatpush1.msra.mxu0 0.0
      %316 = vmatprep.subr.mxu0 0.0
      %317 = vmatpush1.msra.mxu0 0.0
      %318 = vmatprep.subr.mxu0 0.0
      %319 = vmatpush1.msra.mxu0 0.0
      %320 = vmatprep.mubr.f32.mxu0 0.0
      %321 = vmatmul.mubr.f32.gmra.mrb[0].mxu0 %v254
      %v322 = vpop.f32.mrb[0].mxu0
      %v323 = vadd.f32 0.0, %v322
      %v324 = vpop.f32.mrb[0].mxu0
      %325 = vdwg.mxu0
      %vm326 = vcmask 64512
      %v327 = vsel %vm326, %v323, -inf
      %v328 = vrot.slane %v327, 4
      %v329 = vmax.f32 %v327, %v328
      %v330 = vrot.slane %v329, 2
      %v331 = vmax.f32 %v329, %v330
      %v332 = vrot.slane %v331, 1
      %v333 = vmax.f32 %v331, %v332
      %v334 = vsub.f32 %v323, %v333
      %v335 = vmul.f32 %v334, 1.442695
      %v336 = vpow.pop %v335
      %v337 = vsel %vm326, %v336, 0.0
      %v338 = vrot.slane %v337, 4
      %v339 = vadd.f32 %v337, %v338
      %v340 = vrot.slane %v339, 2
      %v341 = vadd.f32 %v339, %v340
      %v342 = vrot.slane %v341, 1
      %v343 = vadd.f32 %v341, %v342
      %v345 = vsel %vm326, %v244, 0
      %v348 = vsel %vm326, %v245, 0
      %v351 = vsel %vm326, %v246, 0
      %v354 = vsel %vm326, %v247, 0
      %356 = vmatprep.subr.mxu0 0.0
      %357 = vmatpush1.msra.mxu0 %v336
      %358 = vmatprep.subr.mxu0 0.0
      %359 = vmatpush1.msra.mxu0 0.0
      %360 = vmatprep.subr.mxu0 0.0
      %361 = vmatpush1.msra.mxu0 0.0
      %362 = vmatprep.subr.mxu0 0.0
      %363 = vmatpush1.msra.mxu0 0.0
      %364 = vmatprep.subr.mxu0 0.0
      %365 = vmatpush1.msra.mxu0 0.0
      %366 = vmatprep.subr.mxu0 0.0
      %367 = vmatpush1.msra.mxu0 0.0
      %368 = vmatprep.subr.mxu0 0.0
      %369 = vmatpush1.msra.mxu0 0.0
      %370 = vmatprep.subr.mxu0 0.0
      %371 = vmatpush1.msra.mxu0 0.0
      %372 = vmatprep.subr.mxu0 0.0
      %373 = vmatpush1.msra.mxu0 0.0
      %374 = vmatprep.subr.mxu0 0.0
      %375 = vmatpush1.msra.mxu0 0.0
      %376 = vmatprep.subr.mxu0 0.0
      %377 = vmatpush1.msra.mxu0 0.0
      %378 = vmatprep.subr.mxu0 0.0
      %379 = vmatpush1.msra.mxu0 0.0
      %380 = vmatprep.subr.mxu0 0.0
      %381 = vmatpush1.msra.mxu0 0.0
      %382 = vmatprep.subr.mxu0 0.0
      %383 = vmatpush1.msra.mxu0 0.0
      %384 = vmatprep.subr.mxu0 0.0
      %385 = vmatpush1.msra.mxu0 0.0
      %386 = vmatprep.subr.mxu0 0.0
      %387 = vmatpush1.msra.mxu0 0.0
      %388 = vmatprep.subr.mxu0 0.0
      %389 = vmatpush1.msra.mxu0 0.0
      %390 = vmatprep.subr.mxu0 0.0
      %391 = vmatpush1.msra.mxu0 0.0
      %392 = vmatprep.subr.mxu0 0.0
      %393 = vmatpush1.msra.mxu0 0.0
      %394 = vmatprep.subr.mxu0 0.0
      %395 = vmatpush1.msra.mxu0 0.0
      %396 = vmatprep.subr.mxu0 0.0
      %397 = vmatpush1.msra.mxu0 0.0
      %398 = vmatprep.subr.mxu0 0.0
      %399 = vmatpush1.msra.mxu0 0.0
      %400 = vmatprep.subr.mxu0 0.0
      %401 = vmatpush1.msra.mxu0 0.0
      %402 = vmatprep.subr.mxu0 0.0
      %403 = vmatpush1.msra.mxu0 0.0
      %404 = vmatprep.subr.mxu0 0.0
      %405 = vmatpush1.msra.mxu0 0.0
      %406 = vmatprep.subr.mxu0 0.0
      %407 = vmatpush1.msra.mxu0 0.0
      %408 = vmatprep.subr.mxu0 0.0
      %409 = vmatpush1.msra.mxu0 0.0
      %410 = vmatprep.subr.mxu0 0.0
      %411 = vmatpush1.msra.mxu0 0.0
      %412 = vmatprep.subr.mxu0 0.0
      %413 = vmatpush1.msra.mxu0 0.0
      %414 = vmatprep.subr.mxu0 0.0
      %415 = vmatpush1.msra.mxu0 0.0
      %416 = vmatprep.subr.mxu0 0.0
      %417 = vmatpush1.msra.mxu0 0.0
      %418 = vmatprep.subr.mxu0 0.0
      %419 = vmatpush1.msra.mxu0 0.0
      %420 = vmatprep.mubr.f32.mxu0 0.0
      %421 = vmatmul.mubr.f32.gmra.mrb[0].mxu0 %v345
      %v422 = vpop.f32.mrb[0].mxu0
      %v423 = vadd.f32 0.0, %v422
      %v424 = vpop.f32.mrb[0].mxu0
      %425 = vmatprep.mubr.f32.mxu0 0.0
      %426 = vmatmul.mubr.f32.gmra.mrb[0].mxu0 %v348
      %v427 = vpop.f32.mrb[0].mxu0
      %v428 = vadd.f32 0.0, %v427
      %v429 = vpop.f32.mrb[0].mxu0
      %430 = vmatprep.mubr.f32.mxu0 0.0
      %431 = vmatmul.mubr.f32.gmra.mrb[0].mxu0 %v351
      %v432 = vpop.f32.mrb[0].mxu0
      %v433 = vadd.f32 0.0, %v432
      %v434 = vpop.f32.mrb[0].mxu0
      %435 = vmatprep.mubr.f32.mxu0 0.0
      %436 = vmatmul.mubr.f32.gmra.mrb[0].mxu0 %v354
      %v437 = vpop.f32.mrb[0].mxu0
      %v438 = vadd.f32 0.0, %v437
      %v439 = vpop.f32.mrb[0].mxu0
      %440 = vdwg.mxu0
      %v441 = vrcp.pop %v343
      %v442 = vmul.f32 %v423, %v441
      %v443 = vmul.f32 %v428, %v441
      %v444 = vmul.f32 %v433, %v441
      %v445 = vmul.f32 %v438, %v441
      %446 = vst.msk [vmem:[%s238] sm:$0xff] %vm326, %v442
      %447 = vst.msk [vmem:[%s238 + $0x8] sm:$0xff] %vm326, %v443
      %448 = vst.msk [vmem:[%s238 + $0x10] sm:$0xff] %vm326, %v444
      %449 = vst.msk [vmem:[%s238 + $0x18] sm:$0xff] %vm326, %v445
      %p450 = scmp.lt.s32.totalorder %s18, 1
      %s451 = scalar_select %p450, %s18, 1
      %p452 = scmp.lt.s32.totalorder %s19, 0
      %s453 = scalar_select %p452, %s19, 0
      %s454 = smul.addr %s451, 4
      %s455 = sadd.s32 %s453, %s454
      %s456 = smul.addr %s455, 8
      %s457 = scalar_lea.vmem %s3, %s456
      // Predicated region
      $region33: #{tpu_custom_call.1} parent=31 // pred_check
        %p458 = pneg %p126
      $region34: #{tpu_custom_call.1} parent=31 // pred_check_branch
        %460 = sbr.rel (%p458) target = $region36
      $region35: #{tpu_custom_call.1} parent=31 // pred_region
        _
      $region36: #{tpu_custom_call.1} parent=31 // pred_fallthru
        _
    $region32: #{tpu_custom_call.1} parent=5 // pred_fallthru
      _
    %p461 = scmp.le.s32.totalorder 2, %s9
    // Predicated region
    $region37: #{tpu_custom_call.1} parent=5 // pred_check
      %p462 = pneg %p461
    $region38: #{tpu_custom_call.1} parent=5 // pred_check_branch
      %464 = sbr.rel (%p462) target = $region40
    $region39: #{tpu_custom_call.1} parent=5 // pred_region
      %s465 = ssub.s32 %s9, 2
      // Predicated region
      $region41: #{tpu_custom_call.1} parent=39 // pred_check
        %p466 = pneg %p132
      $region42: #{tpu_custom_call.1} parent=39 // pred_check_branch
        %468 = sbr.rel (%p466) target = $region44
      $region43: #{tpu_custom_call.1} parent=39 // pred_region
        %p469 = scmp.lt.s32.totalorder %s20, 1
        %s470 = scalar_select %p469, %s20, 1
        %p471 = scmp.lt.s32.totalorder %s21, 0
        %s472 = scalar_select %p471, %s21, 0
        %s473 = smul.addr %s470, 4
        %s474 = sadd.s32 %s472, %s473
        %s475 = smul.addr %s474, 8
        %s476 = scalar_lea.vmem %s3, %s475
      $region44: #{tpu_custom_call.1} parent=39 // pred_fallthru
        _
    $region40: #{tpu_custom_call.1} parent=5 // pred_fallthru
      _
  $region6: #{tpu_custom_call.1} parent=0 // loop_footer
    %s13 = sadd.s32 1, %s9
  $region7: #{tpu_custom_call.1} parent=0 // loop_footer_branch
    %8 = sbr.rel target = $region3
  $region8: #{tpu_custom_call.1} parent=0 // loop_exit
    _

</llo_original>
